<compile_context>
chip_gen: v6e
topology: v6e:2x2x1
jax: 0.10.0
libtpu: 0.0.40
codegen_flags: <defaults>
</compile_context>

<pallas_src>
import functools

import jax
import jax.numpy as jnp
from jax.experimental import pallas as pl
from jax.experimental.pallas import tpu as pltpu


# ----------------------------------------------------------------------------
# Fused Pallas kernel: pool -> conv1d(k=3) over channels -> sigmoid -> scale
# ----------------------------------------------------------------------------

def _eca_kernel(w_ref, x_ref, o_ref, pad_ref, *, inv_hw):
    # w_ref:   (3,) f32 conv taps in SMEM
    # x_ref:   (Bt, C, HWp) block, native dtype (VMEM)
    # o_ref:   (Bt, C, HWp) block, native dtype (VMEM)
    # pad_ref: (Bt, C+2, 1) f32 VMEM scratch (zero-padded pooled vector)
    x = x_ref[...]                                            # (Bt, C, HWp)
    bt, c, _ = x.shape

    # AdaptiveAvgPool2d(1): mean over the spatial (lane) axis, accumulated in
    # f32; padded spatial zeros contribute nothing and we divide by true H*W.
    p = jnp.sum(x, axis=-1, keepdims=True, dtype=jnp.float32) * inv_hw  # (Bt,C,1)

    # Conv1d(in=1, out=1, k=3, padding=1, bias=False) along channels:
    #   att[c] = w0*p[c-1] + w1*p[c] + w2*p[c+1]   (zero padded ends)
    # Realized with a tiny zero-padded scratch: write p at offset 1, read the
    # "prev" window at offset 0 and the "next" window at offset 2.
    pad_ref[...] = jnp.zeros_like(pad_ref)
    pad_ref[:, pl.ds(1, c), :] = p
    p_prev = pad_ref[:, pl.ds(0, c), :]                       # (Bt, C, 1)
    p_next = pad_ref[:, pl.ds(2, c), :]                       # (Bt, C, 1)
    att = w_ref[0] * p_prev + w_ref[1] * p + w_ref[2] * p_next

    gate = jax.nn.sigmoid(att)                                # (Bt, C, 1), EUP
    # Rescale in the native dtype (gate math stayed f32); broadcast over lanes.
    o_ref[...] = (x * gate.astype(x.dtype)).astype(o_ref.dtype)


def _pick_block_batch(b, c, hw, itemsize, target_bytes=2 * 1024 * 1024):
    """Largest Bt that (a) divides B, (b) keeps the x block <= ~2 MiB so the
    double-buffered in+out working set (~4x block) fits every generation's
    default scoped VMEM, and (c) keeps >= 4 grid steps when B allows
    (>= 2 pipelined steps per TensorCore on v7x, >= 2 total on v5e/v6e)."""
    per_batch = max(1, c * hw * itemsize)
    cap = max(1, target_bytes // per_batch)
    if b >= 4:
        cap = min(cap, b // 4)
    elif b >= 2:
        cap = min(cap, b // 2)
    cap = max(1, min(cap, b))
    bt = 1
    for cand in range(1, cap + 1):
        if b % cand == 0:
            bt = cand
    return bt


def eca_layer_2d_forward(x, conv_w):
    """eca_layer_2d.forward. x: (B, C, H, W) NCHW; conv_w: (1, 1, 3) Conv1d weight."""
    b, c, h, w = x.shape
    hw = h * w
    hw_pad = ((hw + 127) // 128) * 128                 # lane-dense stores
    itemsize = jnp.dtype(x.dtype).itemsize

    x3 = x.reshape(b, c, hw)                           # contiguous view, no transpose
    if hw_pad != hw:
        x3 = jnp.pad(x3, ((0, 0), (0, 0), (0, hw_pad - hw)))

    bt = _pick_block_batch(b, c, hw_pad, itemsize)
    grid = (b // bt,)

    kernel = functools.partial(_eca_kernel, inv_hw=1.0 / float(hw))

    out = pl.pallas_call(
        kernel,
        out_shape=jax.ShapeDtypeStruct((b, c, hw_pad), x.dtype),
        grid=grid,
        in_specs=[
            pl.BlockSpec(memory_space=pltpu.MemorySpace.SMEM),       # conv taps (3,)
            pl.BlockSpec((bt, c, hw_pad), lambda i: (i, 0, 0)),      # x block
        ],
        out_specs=pl.BlockSpec((bt, c, hw_pad), lambda i: (i, 0, 0)),
        scratch_shapes=[pltpu.VMEM((bt, c + 2, 1), jnp.float32)],
        compiler_params=pltpu.CompilerParams(
            dimension_semantics=("parallel",)),
        cost_estimate=pl.CostEstimate(
            flops=3 * b * c * hw,
            transcendentals=b * c,
            bytes_accessed=2 * b * c * hw_pad * itemsize + 3 * 4,
        ),
    )(conv_w.reshape(3).astype(jnp.float32), x3)

    if hw_pad != hw:
        out = out[:, :, :hw]
    return out.reshape(b, c, h, w)


# ----------------------------------------------------------------------------
# Pure-JAX reference (for correctness assertion only)
# ----------------------------------------------------------------------------

def eca_reference(x, conv_w):
    wts = conv_w.reshape(3)
    pooled = jnp.mean(x, axis=(2, 3))                          # (B, C)
    pp = jnp.pad(pooled, ((0, 0), (1, 1)))
    att = wts[0] * pp[:, :-2] + wts[1] * pp[:, 1:-1] + wts[2] * pp[:, 2:]
    gate = jax.nn.sigmoid(att)[:, :, None, None]
    return gate * x


# ----------------------------------------------------------------------------
# Main
# ----------------------------------------------------------------------------

if __name__ == "__main__":
    B, C, H, W = 2, 64, 16, 16           # HW = 256 -> lane-dense last axis

    key = jax.random.PRNGKey(0)
    kx, kw = jax.random.split(key)
    x = jax.random.normal(kx, (B, C, H, W), jnp.float32)
    # Synthetic Conv1d(1, 1, 3, bias=False) weight (PyTorch shape (1, 1, 3)).
    bound = 1.0 / (3.0 ** 0.5)
    conv_w = jax.random.uniform(kw, (1, 1, 3), jnp.float32, -bound, bound)

    out = jax.jit(eca_layer_2d_forward)(x, conv_w)
    out = jax.block_until_ready(out)

    ref = eca_reference(x, conv_w)
    assert out.shape == (B, C, H, W)
    assert bool(jnp.all(jnp.isfinite(out)))
    assert bool(jnp.allclose(out, ref, atol=1e-5, rtol=1e-5))
    print("KERNEL_OK")
</pallas_src>

<mosaic_0001>
module attributes {stable_mosaic.version = 11 : i64} {
  func.func @_eca_kernel(%arg0: i32, %arg1: memref<3xf32, #tpu.memory_space<smem>>, %arg2: memref<1x64x256xf32, #tpu.memory_space<vmem>>, %arg3: memref<1x64x256xf32, #tpu.memory_space<vmem>>, %arg4: memref<1x66x1xf32, #tpu.memory_space<vmem>>) attributes {dimension_semantics = [#tpu.dimension_semantics<parallel>], iteration_bounds = array<i64: 2>, scalar_prefetch = 0 : i64, scratch_operands = 1 : i64, tpu.core_type = #tpu.core_type<tc>, window_params = [{transform_indices = @transform_0, window_bounds = array<i64: 3>}, {transform_indices = @transform_1, window_bounds = array<i64: 1, 64, 256>}, {transform_indices = @transform_2, window_bounds = array<i64: 1, 64, 256>}]} {
    %c0 = arith.constant 0 : index
    %c0_0 = arith.constant 0 : index
    %c0_1 = arith.constant 0 : index
    %0 = vector.load %arg2[%c0, %c0_0, %c0_1] : memref<1x64x256xf32, #tpu.memory_space<vmem>>, vector<1x64x256xf32>
    %cst = arith.constant dense<0.000000e+00> : vector<1x64xf32>
    %1 = vector.multi_reduction <add>, %0, %cst [2] : vector<1x64x256xf32> to vector<1x64xf32>
    %2 = vector.shape_cast %1 : vector<1x64xf32> to vector<1x64x1xf32>
    %cst_2 = arith.constant 3.906250e-03 : f32
    %3 = vector.broadcast %cst_2 : f32 to vector<1x64x1xf32>
    %4 = arith.mulf %2, %3 : vector<1x64x1xf32>
    %cst_3 = arith.constant 0.000000e+00 : f32
    %5 = vector.broadcast %cst_3 : f32 to vector<1x66x1xf32>
    %c0_4 = arith.constant 0 : index
    %c0_5 = arith.constant 0 : index
    %c0_6 = arith.constant 0 : index
    %6 = vector.load %arg4[%c0_4, %c0_5, %c0_6] : memref<1x66x1xf32, #tpu.memory_space<vmem>>, vector<1x66x1xf32>
    tpu.vector_store %arg4[%c0_4, %c0_5, %c0_6], %5 {strides = array<i32>} : memref<1x66x1xf32, #tpu.memory_space<vmem>>, vector<1x66x1xf32>,
    %c0_7 = arith.constant 0 : index
    %c1 = arith.constant 1 : index
    %c0_8 = arith.constant 0 : index
    %7 = vector.load %arg4[%c0_7, %c1, %c0_8] : memref<1x66x1xf32, #tpu.memory_space<vmem>>, vector<1x64x1xf32>
    tpu.vector_store %arg4[%c0_7, %c1, %c0_8], %4 {strides = array<i32>} : memref<1x66x1xf32, #tpu.memory_space<vmem>>, vector<1x64x1xf32>,
    %c0_9 = arith.constant 0 : index
    %c0_10 = arith.constant 0 : index
    %c0_11 = arith.constant 0 : index
    %8 = vector.load %arg4[%c0_9, %c0_10, %c0_11] : memref<1x66x1xf32, #tpu.memory_space<vmem>>, vector<1x64x1xf32>
    %c0_12 = arith.constant 0 : index
    %c2 = arith.constant 2 : index
    %c0_13 = arith.constant 0 : index
    %9 = vector.load %arg4[%c0_12, %c2, %c0_13] : memref<1x66x1xf32, #tpu.memory_space<vmem>>, vector<1x64x1xf32>
    %c0_14 = arith.constant 0 : index
    %10 = memref.load %arg1[%c0_14] : memref<3xf32, #tpu.memory_space<smem>>
    %11 = vector.broadcast %10 : f32 to vector<1x64x1xf32>
    %12 = arith.mulf %11, %8 : vector<1x64x1xf32>
    %c1_15 = arith.constant 1 : index
    %13 = memref.load %arg1[%c1_15] : memref<3xf32, #tpu.memory_space<smem>>
    %14 = vector.broadcast %13 : f32 to vector<1x64x1xf32>
    %15 = arith.mulf %14, %4 : vector<1x64x1xf32>
    %16 = arith.addf %12, %15 : vector<1x64x1xf32>
    %c2_16 = arith.constant 2 : index
    %17 = memref.load %arg1[%c2_16] : memref<3xf32, #tpu.memory_space<smem>>
    %18 = vector.broadcast %17 : f32 to vector<1x64x1xf32>
    %19 = arith.mulf %18, %9 : vector<1x64x1xf32>
    %20 = arith.addf %16, %19 : vector<1x64x1xf32>
    %21 = arith.negf %20 : vector<1x64x1xf32>
    %22 = math.exp %21 : vector<1x64x1xf32>
    %cst_17 = arith.constant 1.000000e+00 : f32
    %23 = vector.broadcast %cst_17 : f32 to vector<1x64x1xf32>
    %24 = arith.addf %23, %22 : vector<1x64x1xf32>
    %25 = arith.divf %23, %24 : vector<1x64x1xf32>
    %26 = vector.broadcast %25 : vector<1x64x1xf32> to vector<1x64x256xf32>
    %27 = arith.mulf %0, %26 : vector<1x64x256xf32>
    %c0_18 = arith.constant 0 : index
    %c0_19 = arith.constant 0 : index
    %c0_20 = arith.constant 0 : index
    %28 = vector.load %arg3[%c0_18, %c0_19, %c0_20] : memref<1x64x256xf32, #tpu.memory_space<vmem>>, vector<1x64x256xf32>
    tpu.vector_store %arg3[%c0_18, %c0_19, %c0_20], %27 {strides = array<i32>} : memref<1x64x256xf32, #tpu.memory_space<vmem>>, vector<1x64x256xf32>,
    return
  }
  func.func @transform_0(%arg0: i32) -> i32 {
    %c0_i32 = arith.constant 0 : i32
    %c0_i32_0 = arith.constant 0 : i32
    return %c0_i32 : i32
  }
  func.func @transform_1(%arg0: i32) -> (i32, i32, i32) {
    %c0_i32 = arith.constant 0 : i32
    %c0_i32_0 = arith.constant 0 : i32
    %c0_i32_1 = arith.constant 0 : i32
    return %arg0, %c0_i32, %c0_i32_0 : i32, i32, i32
  }
  func.func @transform_2(%arg0: i32) -> (i32, i32, i32) {
    %c0_i32 = arith.constant 0 : i32
    %c0_i32_0 = arith.constant 0 : i32
    %c0_i32_1 = arith.constant 0 : i32
    return %arg0, %c0_i32, %c0_i32_0 : i32, i32, i32
  }
}

</mosaic_0001>

<llo_original>
// kernel: eca_layer_2d_forward.1
$region0: #{eca_layer_2d_forward.1}
  #allocation0 [shape = 'u32[]', space=smem, size = 0x4, offset = 0x4, fixed_abs, tag = 'smem constant byte address 0x4 - core index']
  #allocation1 [shape = 'u32[144,128]{1,0:T(1,128)}', space=vmem, size = 0x12000, scoped, tag = 'internal scratch']
  #allocation2 [shape = 'f32[1,66,1]{2,1,0:T(8,128)}', space=vmem, size = 0x9000, scoped, tag = 'scratch operand']
  %s0 = inlined_call_operand.vmem [shape: f32[3], index: 0, kind: input, shape index: {}]
  %s1 = inlined_call_operand.vmem [shape: f32[2,64,256], index: 1, kind: input, shape index: {}]
  %s2 = inlined_call_operand.vmem [shape: f32[2,64,256], index: 2, kind: output, shape index: {}]
  %s3 = sld [smem:[#allocation0]]
  $region45: #{eca_layer_2d_forward.1} parent=0
    _
  %s5 = ssub.s32 1, %s3
  %s6 = scalar_select 0, %s5, %s3
  $region1: #{eca_layer_2d_forward.1} parent=0
    #allocation3 [shape = 'u8[512]{0}', space=smem, size = 0x200, scoped, tag = 'input window, operand 0, single buffered']
    #allocation4 [shape = 's32[2]{0}', space=sflag, size = 0x8, scoped, tag = 'scoped memory for eca_layer_2d_forward.1']
    %7 = vsyncpa [#allocation4], 0
    loop: start=0, step=1, limit=4
    $region2: #{eca_layer_2d_forward.1} parent=1 // loop_pre_header
      _
    $region3: #{eca_layer_2d_forward.1} parent=1 // loop_header
      %s9 = sphi 0, %s13
      %p10 = scmp.ge.s32.totalorder %s9, 4
      %s17 = sphi 0, %s17
      %s19 = sphi 0, %s17
      %s20 = sphi 0, %s19
      %s34 = sphi 0, %s20
      %s40 = sphi 0, %s42
      %s43 = sphi 0, %s40
      %s44 = sphi 0, %s43
      %s60 = sphi 0, %s44
      %s66 = sphi 0, %s68
      %s69 = sphi 0, %s66
      %s70 = sphi 0, %s69
      %s86 = sphi 0, %s70
    $region4: #{eca_layer_2d_forward.1} parent=1 // loop_header_branch
      %12 = sbr.rel (%p10) target = $region8
    $region5: #{eca_layer_2d_forward.1} parent=1 // loop_body
      %s14 = ssub.s32 %s9, 1
      %s15 = ssub.s32 %s9, 2
      %s16 = sadd.s32 %s9, 1
      %s18 = sadd.s32 %s17, 1
      %p21 = scmp.eq.s32.totalorder %s9, 1
      %p22 = scmp.ne.s32.totalorder %s17, %s19
      %p23 = scmp.eq.s32.totalorder %s9, 0
      %p24 = por %p22, %p23
      %p25 = scmp.ne.s32.totalorder %s17, %s19
      %p26 = scmp.eq.s32.totalorder %s14, 1
      %p27 = por %p25, %p26
      %p28 = scmp.ne.s32.totalorder %s19, %s20
      %p29 = scmp.eq.s32.totalorder %s14, 0
      %p30 = por %p28, %p29
      %p31 = scmp.ne.s32.totalorder %s19, %s20
      %p32 = scmp.eq.s32.totalorder %s15, 1
      %p33 = por %p31, %p32
      %p35 = scmp.ne.s32.totalorder %s20, %s34
      %p36 = scmp.eq.s32.totalorder %s15, 0
      %p37 = por %p35, %p36
      %s38 = ssub.s32 %s9, %s16
      %p39 = scmp.eq.s32.totalorder %s38, 0
      %s41 = sadd.s32 %s40, 1
      %s42 = scalar_select %p39, %s40, %s41
      %p45 = pneg %p39
      %p46 = scmp.eq.s32.totalorder %s9, 1
      %p47 = por %p45, %p46
      %p48 = scmp.ne.s32.totalorder %s40, %s43
      %p49 = scmp.eq.s32.totalorder %s9, 0
      %p50 = por %p48, %p49
      %p51 = scmp.ne.s32.totalorder %s40, %s43
      %p52 = scmp.eq.s32.totalorder %s14, 1
      %p53 = por %p51, %p52
      %p54 = scmp.ne.s32.totalorder %s43, %s44
      %p55 = scmp.eq.s32.totalorder %s14, 0
      %p56 = por %p54, %p55
      %p57 = scmp.ne.s32.totalorder %s43, %s44
      %p58 = scmp.eq.s32.totalorder %s15, 1
      %p59 = por %p57, %p58
      %p61 = scmp.ne.s32.totalorder %s44, %s60
      %p62 = scmp.eq.s32.totalorder %s15, 0
      %p63 = por %p61, %p62
      %s64 = ssub.s32 %s9, %s16
      %p65 = scmp.eq.s32.totalorder %s64, 0
      %s67 = sadd.s32 %s66, 1
      %s68 = scalar_select %p65, %s66, %s67
      %p71 = pneg %p65
      %p72 = scmp.eq.s32.totalorder %s9, 1
      %p73 = por %p71, %p72
      %p74 = scmp.ne.s32.totalorder %s66, %s69
      %p75 = scmp.eq.s32.totalorder %s9, 0
      %p76 = por %p74, %p75
      %p77 = scmp.ne.s32.totalorder %s66, %s69
      %p78 = scmp.eq.s32.totalorder %s14, 1
      %p79 = por %p77, %p78
      %p80 = scmp.ne.s32.totalorder %s69, %s70
      %p81 = scmp.eq.s32.totalorder %s14, 0
      %p82 = por %p80, %p81
      %p83 = scmp.ne.s32.totalorder %s69, %s70
      %p84 = scmp.eq.s32.totalorder %s15, 1
      %p85 = por %p83, %p84
      %p87 = scmp.ne.s32.totalorder %s70, %s86
      %p88 = scmp.eq.s32.totalorder %s15, 0
      %p89 = por %p87, %p88
      %p90 = scmp.le.s32.totalorder 1, %s9
      %p91 = scmp.lt.s32.totalorder %s9, 3
      %p92 = pnand %p90, %p91
      %p93 = pneg %p92
      // Predicated region
      $region9: #{eca_layer_2d_forward.1} parent=5 // pred_check
        _
      $region10: #{eca_layer_2d_forward.1} parent=5 // pred_check_branch
        %95 = sbr.rel (%p92) target = $region12
      $region11: #{eca_layer_2d_forward.1} parent=5 // pred_region
        %s96 = ssub.s32 %s9, 1
        // Predicated region
        $region13: #{eca_layer_2d_forward.1} parent=11 // pred_check
          %p97 = pneg %p30
        $region14: #{eca_layer_2d_forward.1} parent=11 // pred_check_branch
          %99 = sbr.rel (%p97) target = $region16
        $region15: #{eca_layer_2d_forward.1} parent=11 // pred_region
          %s101 = ssub.s32 16, 16
          %102 = vsyncadd [#allocation4], %s101
          %s104 = sshll.u32 %s0, 4
          %s105 = int_to_ptr.vmem [resolvable:$true] %s104
          %107 = dma.vmem_to_smem %s105, 16, [#allocation3], [#allocation4]
        $region16: #{eca_layer_2d_forward.1} parent=11 // pred_fallthru
          _
      $region12: #{eca_layer_2d_forward.1} parent=5 // pred_fallthru
        _
      %p108 = scmp.lt.s32.totalorder %s9, 2
      // Predicated region
      $region17: #{eca_layer_2d_forward.1} parent=5 // pred_check
        %p109 = pneg %p108
      $region18: #{eca_layer_2d_forward.1} parent=5 // pred_check_branch
        %111 = sbr.rel (%p109) target = $region20
      $region19: #{eca_layer_2d_forward.1} parent=5 // pred_region
        // Predicated region
        $region21: #{eca_layer_2d_forward.1} parent=19 // pred_check
          %p112 = pneg %p50
        $region22: #{eca_layer_2d_forward.1} parent=19 // pred_check_branch
          %114 = sbr.rel (%p112) target = $region24
        $region23: #{eca_layer_2d_forward.1} parent=19 // pred_region
          %p115 = scmp.lt.s32.totalorder %s9, 1
          %s116 = scalar_select %p115, %s9, 1
          %s117 = smul.addr %s116, 16
          %s118 = smul.addr %s117, 8
          %s119 = scalar_lea.vmem %s1, %s118
        $region24: #{eca_layer_2d_forward.1} parent=19 // pred_fallthru
          _
      $region20: #{eca_layer_2d_forward.1} parent=5 // pred_fallthru
        _
      %p120 = scmp.le.s32.totalorder 1, %s9
      %p121 = scmp.lt.s32.totalorder %s9, 3
      %p122 = pnand %p120, %p121
      %p123 = pneg %p122
      // Predicated region
      $region25: #{eca_layer_2d_forward.1} parent=5 // pred_check
        _
      $region26: #{eca_layer_2d_forward.1} parent=5 // pred_check_branch
        %125 = sbr.rel (%p122) target = $region28
      $region27: #{eca_layer_2d_forward.1} parent=5 // pred_region
        %s126 = ssub.s32 %s9, 1
        // Predicated region
        $region29: #{eca_layer_2d_forward.1} parent=27 // pred_check
          %p127 = pneg %p30
        $region30: #{eca_layer_2d_forward.1} parent=27 // pred_check_branch
          %129 = sbr.rel (%p127) target = $region32
        $region31: #{eca_layer_2d_forward.1} parent=27 // pred_region
          %130 = dma.done [#allocation4], 16
        $region32: #{eca_layer_2d_forward.1} parent=27 // pred_fallthru
          _
        %131 = sfence
        %p132 = pneg %p30
        %p133 = pneg %p27
        %p134 = scmp.lt.s32.totalorder %s14, 1
        %s135 = scalar_select %p134, %s14, 1
        %s136 = smul.addr %s135, 16
        %s137 = smul.addr %s136, 8
        %s138 = scalar_lea.vmem %s1, %s137
        %p139 = pneg %p56
        %p140 = pneg %p53
        %p141 = pneg %p82
        %p142 = pneg %p79
        %p143 = scmp.lt.s32.totalorder %s14, 1
        %s144 = scalar_select %p143, %s14, 1
        %s145 = smul.addr %s144, 16
        %s146 = smul.addr %s145, 8
        %s147 = scalar_lea.vmem %s2, %s146
        %p148 = scmp.lt.s32.totalorder %s14, 1
        %s149 = scalar_select %p148, %s14, 1
        %s150 = smul.addr %s149, 16
        %s151 = smul.addr %s150, 8
        %s152 = scalar_lea.vmem %s1, %s151
        %p153 = scmp.lt.s32.totalorder %s14, 1
        %s154 = scalar_select %p153, %s14, 1
        %s155 = smul.addr %s154, 16
        %s156 = smul.addr %s155, 8
        %s157 = scalar_lea.vmem %s2, %s156
        %v158 = vld [vmem:[%s152] sm:$0xff]
        %v159 = vld [vmem:[%s152 + $0x8] sm:$0xff]
        %v160 = vld [vmem:[%s152 + $0x10] sm:$0xff]
        %v161 = vld [vmem:[%s152 + $0x18] sm:$0xff]
        %v162 = vld [vmem:[%s152 + $0x20] sm:$0xff]
        %v163 = vld [vmem:[%s152 + $0x28] sm:$0xff]
        %v164 = vld [vmem:[%s152 + $0x30] sm:$0xff]
        %v165 = vld [vmem:[%s152 + $0x38] sm:$0xff]
        %v166 = vld [vmem:[%s152 + $0x40] sm:$0xff]
        %v167 = vld [vmem:[%s152 + $0x48] sm:$0xff]
        %v168 = vld [vmem:[%s152 + $0x50] sm:$0xff]
        %v169 = vld [vmem:[%s152 + $0x58] sm:$0xff]
        %v170 = vld [vmem:[%s152 + $0x60] sm:$0xff]
        %v171 = vld [vmem:[%s152 + $0x68] sm:$0xff]
        %v172 = vld [vmem:[%s152 + $0x70] sm:$0xff]
        %v173 = vld [vmem:[%s152 + $0x78] sm:$0xff]
        %v174 = vadd.f32 %v158, %v159
        %175 = vadd.xlane.f32.xlu0 %v174
        %v176 = vpop.xlane.xlu0 %175
        %v177 = vadd.f32 %v160, %v161
        %178 = vadd.xlane.f32.xlu0 %v177
        %v179 = vpop.xlane.xlu0 %178
        %v180 = vadd.f32 %v162, %v163
        %181 = vadd.xlane.f32.xlu0 %v180
        %v182 = vpop.xlane.xlu0 %181
        %v183 = vadd.f32 %v164, %v165
        %184 = vadd.xlane.f32.xlu0 %v183
        %v185 = vpop.xlane.xlu0 %184
        %v186 = vadd.f32 %v166, %v167
        %187 = vadd.xlane.f32.xlu0 %v186
        %v188 = vpop.xlane.xlu0 %187
        %v189 = vadd.f32 %v168, %v169
        %190 = vadd.xlane.f32.xlu0 %v189
        %v191 = vpop.xlane.xlu0 %190
        %v192 = vadd.f32 %v170, %v171
        %193 = vadd.xlane.f32.xlu0 %v192
        %v194 = vpop.xlane.xlu0 %193
        %v195 = vadd.f32 %v172, %v173
        %196 = vadd.xlane.f32.xlu0 %v195
        %v197 = vpop.xlane.xlu0 %196
        %v198 = vmul.f32 %v176, 0.00390625
        %v199 = vmul.f32 %v179, 0.00390625
        %v200 = vmul.f32 %v182, 0.00390625
        %v201 = vmul.f32 %v185, 0.00390625
        %v202 = vmul.f32 %v188, 0.00390625
        %v203 = vmul.f32 %v191, 0.00390625
        %v204 = vmul.f32 %v194, 0.00390625
        %v205 = vmul.f32 %v197, 0.00390625
        %vm206 = vcmask 7168
        %207 = vst.msk [vmem:[#allocation2] sm:$0xff] %vm206, 0.0
        %208 = vst.msk [vmem:[#allocation2 + $0x8] sm:$0xff] %vm206, 0.0
        %209 = vst.msk [vmem:[#allocation2 + $0x10] sm:$0xff] %vm206, 0.0
        %210 = vst.msk [vmem:[#allocation2 + $0x18] sm:$0xff] %vm206, 0.0
        %211 = vst.msk [vmem:[#allocation2 + $0x20] sm:$0xff] %vm206, 0.0
        %212 = vst.msk [vmem:[#allocation2 + $0x28] sm:$0xff] %vm206, 0.0
        %213 = vst.msk [vmem:[#allocation2 + $0x30] sm:$0xff] %vm206, 0.0
        %214 = vst.msk [vmem:[#allocation2 + $0x38] sm:$0xff] %vm206, 0.0
        %vm215 = vcmask 1024
        %216 = vst.msk [vmem:[#allocation2 + $0x40] sm:$0x3] %vm215, 0.0
        %217 = vst.msk [vmem:[#allocation2 + $0x1] sm:$0xff] %vm206, %v198
        %218 = vst.msk [vmem:[#allocation2 + $0x9] sm:$0xff] %vm206, %v199
        %219 = vst.msk [vmem:[#allocation2 + $0x11] sm:$0xff] %vm206, %v200
        %220 = vst.msk [vmem:[#allocation2 + $0x19] sm:$0xff] %vm206, %v201
        %221 = vst.msk [vmem:[#allocation2 + $0x21] sm:$0xff] %vm206, %v202
        %222 = vst.msk [vmem:[#allocation2 + $0x29] sm:$0xff] %vm206, %v203
        %223 = vst.msk [vmem:[#allocation2 + $0x31] sm:$0xff] %vm206, %v204
        %224 = vst.msk [vmem:[#allocation2 + $0x39] sm:$0xff] %vm206, %v205
        %v225 = vld [vmem:[#allocation2] sm:$0xff]
        %v226 = vld [vmem:[#allocation2 + $0x8] sm:$0xff]
        %v227 = vld [vmem:[#allocation2 + $0x10] sm:$0xff]
        %v228 = vld [vmem:[#allocation2 + $0x18] sm:$0xff]
        %v229 = vld [vmem:[#allocation2 + $0x20] sm:$0xff]
        %v230 = vld [vmem:[#allocation2 + $0x28] sm:$0xff]
        %v231 = vld [vmem:[#allocation2 + $0x30] sm:$0xff]
        %v232 = vld [vmem:[#allocation2 + $0x38] sm:$0xff]
        %v233 = vld [vmem:[#allocation2 + $0x2] sm:$0xff]
        %v234 = vld [vmem:[#allocation2 + $0xa] sm:$0xff]
        %v235 = vld [vmem:[#allocation2 + $0x12] sm:$0xff]
        %v236 = vld [vmem:[#allocation2 + $0x1a] sm:$0xff]
        %v237 = vld [vmem:[#allocation2 + $0x22] sm:$0xff]
        %v238 = vld [vmem:[#allocation2 + $0x2a] sm:$0xff]
        %v239 = vld [vmem:[#allocation2 + $0x32] sm:$0xff]
        %v240 = vld [vmem:[#allocation2 + $0x3a] sm:$0xff]
        %s241 = sld [smem:[#allocation3]]
        %v242 = vstv %s241
        %v243 = vmul.f32 %v242, %v225
        %v244 = vmul.f32 %v242, %v226
        %v245 = vmul.f32 %v242, %v227
        %v246 = vmul.f32 %v242, %v228
        %v247 = vmul.f32 %v242, %v229
        %v248 = vmul.f32 %v242, %v230
        %v249 = vmul.f32 %v242, %v231
        %v250 = vmul.f32 %v242, %v232
        %s251 = sld [smem:[#allocation3 + $0x1]]
        %v252 = vstv %s251
        %v253 = vmul.f32 %v252, %v198
        %v254 = vmul.f32 %v252, %v199
        %v255 = vmul.f32 %v252, %v200
        %v256 = vmul.f32 %v252, %v201
        %v257 = vmul.f32 %v252, %v202
        %v258 = vmul.f32 %v252, %v203
        %v259 = vmul.f32 %v252, %v204
        %v260 = vmul.f32 %v252, %v205
        %v261 = vadd.f32 %v243, %v253
        %v262 = vadd.f32 %v244, %v254
        %v263 = vadd.f32 %v245, %v255
        %v264 = vadd.f32 %v246, %v256
        %v265 = vadd.f32 %v247, %v257
        %v266 = vadd.f32 %v248, %v258
        %v267 = vadd.f32 %v249, %v259
        %v268 = vadd.f32 %v250, %v260
        %s269 = sld [smem:[#allocation3 + $0x2]]
        %v270 = vstv %s269
        %v271 = vmul.f32 %v270, %v233
        %v272 = vmul.f32 %v270, %v234
        %v273 = vmul.f32 %v270, %v235
        %v274 = vmul.f32 %v270, %v236
        %v275 = vmul.f32 %v270, %v237
        %v276 = vmul.f32 %v270, %v238
        %v277 = vmul.f32 %v270, %v239
        %v278 = vmul.f32 %v270, %v240
        %v279 = vadd.f32 %v261, %v271
        %v280 = vadd.f32 %v262, %v272
        %v281 = vadd.f32 %v263, %v273
        %v282 = vadd.f32 %v264, %v274
        %v283 = vadd.f32 %v265, %v275
        %v284 = vadd.f32 %v266, %v276
        %v285 = vadd.f32 %v267, %v277
        %v286 = vadd.f32 %v268, %v278
        %v287 = vxor.u32 %v279, 2147483648
        %v288 = vxor.u32 %v280, 2147483648
        %v289 = vxor.u32 %v281, 2147483648
        %v290 = vxor.u32 %v282, 2147483648
        %v291 = vxor.u32 %v283, 2147483648
        %v292 = vxor.u32 %v284, 2147483648
        %v293 = vxor.u32 %v285, 2147483648
        %v294 = vxor.u32 %v286, 2147483648
        %v295 = vmul.f32 %v287, 1.442695
        %v296 = vpow.pop %v295
        %v297 = vmul.f32 %v288, 1.442695
        %v298 = vpow.pop %v297
        %v299 = vmul.f32 %v289, 1.442695
        %v300 = vpow.pop %v299
        %v301 = vmul.f32 %v290, 1.442695
        %v302 = vpow.pop %v301
        %v303 = vmul.f32 %v291, 1.442695
        %v304 = vpow.pop %v303
        %v305 = vmul.f32 %v292, 1.442695
        %v306 = vpow.pop %v305
        %v307 = vmul.f32 %v293, 1.442695
        %v308 = vpow.pop %v307
        %v309 = vmul.f32 %v294, 1.442695
        %v310 = vpow.pop %v309
        %v311 = vadd.f32 %v296, 1.0
        %v312 = vadd.f32 %v298, 1.0
        %v313 = vadd.f32 %v300, 1.0
        %v314 = vadd.f32 %v302, 1.0
        %v315 = vadd.f32 %v304, 1.0
        %v316 = vadd.f32 %v306, 1.0
        %v317 = vadd.f32 %v308, 1.0
        %v318 = vadd.f32 %v310, 1.0
        %v319 = vrcp.pop %v311
        %v320 = vmul.f32 1.0, %v319
        %v321 = vrcp.pop %v312
        %v322 = vmul.f32 1.0, %v321
        %v323 = vrcp.pop %v313
        %v324 = vmul.f32 1.0, %v323
        %v325 = vrcp.pop %v314
        %v326 = vmul.f32 1.0, %v325
        %v327 = vrcp.pop %v315
        %v328 = vmul.f32 1.0, %v327
        %v329 = vrcp.pop %v316
        %v330 = vmul.f32 1.0, %v329
        %v331 = vrcp.pop %v317
        %v332 = vmul.f32 1.0, %v331
        %v333 = vrcp.pop %v318
        %v334 = vmul.f32 1.0, %v333
        %336 = vset.pattern.permute.xlu0 0
        %337 = vperm.xlu0 %336, %v320
        %v338 = vpop.permute.xlu0 %337
        %341 = vset.pattern.permute.xlu0 0
        %342 = vperm.xlu0 %341, %v322
        %v343 = vpop.permute.xlu0 %342
        %346 = vset.pattern.permute.xlu0 0
        %347 = vperm.xlu0 %346, %v324
        %v348 = vpop.permute.xlu0 %347
        %351 = vset.pattern.permute.xlu0 0
        %352 = vperm.xlu0 %351, %v326
        %v353 = vpop.permute.xlu0 %352
        %356 = vset.pattern.permute.xlu0 0
        %357 = vperm.xlu0 %356, %v328
        %v358 = vpop.permute.xlu0 %357
        %361 = vset.pattern.permute.xlu0 0
        %362 = vperm.xlu0 %361, %v330
        %v363 = vpop.permute.xlu0 %362
        %366 = vset.pattern.permute.xlu0 0
        %367 = vperm.xlu0 %366, %v332
        %v368 = vpop.permute.xlu0 %367
        %371 = vset.pattern.permute.xlu0 0
        %372 = vperm.xlu0 %371, %v334
        %v373 = vpop.permute.xlu0 %372
        %v375 = vmul.f32 %v158, %v338
        %v376 = vmul.f32 %v159, %v338
        %v377 = vmul.f32 %v160, %v343
        %v378 = vmul.f32 %v161, %v343
        %v379 = vmul.f32 %v162, %v348
        %v380 = vmul.f32 %v163, %v348
        %v381 = vmul.f32 %v164, %v353
        %v382 = vmul.f32 %v165, %v353
        %v383 = vmul.f32 %v166, %v358
        %v384 = vmul.f32 %v167, %v358
        %v385 = vmul.f32 %v168, %v363
        %v386 = vmul.f32 %v169, %v363
        %v387 = vmul.f32 %v170, %v368
        %v388 = vmul.f32 %v171, %v368
        %v389 = vmul.f32 %v172, %v373
        %v390 = vmul.f32 %v173, %v373
        %391 = vst [vmem:[%s157] sm:$0xff] %v375
        %392 = vst [vmem:[%s157 + $0x8] sm:$0xff] %v376
        %393 = vst [vmem:[%s157 + $0x10] sm:$0xff] %v377
        %394 = vst [vmem:[%s157 + $0x18] sm:$0xff] %v378
        %395 = vst [vmem:[%s157 + $0x20] sm:$0xff] %v379
        %396 = vst [vmem:[%s157 + $0x28] sm:$0xff] %v380
        %397 = vst [vmem:[%s157 + $0x30] sm:$0xff] %v381
        %398 = vst [vmem:[%s157 + $0x38] sm:$0xff] %v382
        %399 = vst [vmem:[%s157 + $0x40] sm:$0xff] %v383
        %400 = vst [vmem:[%s157 + $0x48] sm:$0xff] %v384
        %401 = vst [vmem:[%s157 + $0x50] sm:$0xff] %v385
        %402 = vst [vmem:[%s157 + $0x58] sm:$0xff] %v386
        %403 = vst [vmem:[%s157 + $0x60] sm:$0xff] %v387
        %404 = vst [vmem:[%s157 + $0x68] sm:$0xff] %v388
        %405 = vst [vmem:[%s157 + $0x70] sm:$0xff] %v389
        %406 = vst [vmem:[%s157 + $0x78] sm:$0xff] %v390
        %p407 = scmp.lt.s32.totalorder %s14, 1
        %s408 = scalar_select %p407, %s14, 1
        %s409 = smul.addr %s408, 16
        %s410 = smul.addr %s409, 8
        %s411 = scalar_lea.vmem %s2, %s410
        // Predicated region
        $region33: #{eca_layer_2d_forward.1} parent=27 // pred_check
          %p412 = pneg %p79
        $region34: #{eca_layer_2d_forward.1} parent=27 // pred_check_branch
          %414 = sbr.rel (%p412) target = $region36
        $region35: #{eca_layer_2d_forward.1} parent=27 // pred_region
          _
        $region36: #{eca_layer_2d_forward.1} parent=27 // pred_fallthru
          _
      $region28: #{eca_layer_2d_forward.1} parent=5 // pred_fallthru
        _
      %p415 = scmp.le.s32.totalorder 2, %s9
      // Predicated region
      $region37: #{eca_layer_2d_forward.1} parent=5 // pred_check
        %p416 = pneg %p415
      $region38: #{eca_layer_2d_forward.1} parent=5 // pred_check_branch
        %418 = sbr.rel (%p416) target = $region40
      $region39: #{eca_layer_2d_forward.1} parent=5 // pred_region
        %s419 = ssub.s32 %s9, 2
        // Predicated region
        $region41: #{eca_layer_2d_forward.1} parent=39 // pred_check
          %p420 = pneg %p85
        $region42: #{eca_layer_2d_forward.1} parent=39 // pred_check_branch
          %422 = sbr.rel (%p420) target = $region44
        $region43: #{eca_layer_2d_forward.1} parent=39 // pred_region
          %p423 = scmp.lt.s32.totalorder %s15, 1
          %s424 = scalar_select %p423, %s15, 1
          %s425 = smul.addr %s424, 16
          %s426 = smul.addr %s425, 8
          %s427 = scalar_lea.vmem %s2, %s426
        $region44: #{eca_layer_2d_forward.1} parent=39 // pred_fallthru
          _
      $region40: #{eca_layer_2d_forward.1} parent=5 // pred_fallthru
        _
    $region6: #{eca_layer_2d_forward.1} parent=1 // loop_footer
      %s13 = sadd.s32 1, %s9
    $region7: #{eca_layer_2d_forward.1} parent=1 // loop_footer_branch
      %8 = sbr.rel target = $region3
    $region8: #{eca_layer_2d_forward.1} parent=1 // loop_exit
      _
    %428 = vsyncpa [#allocation4], 1
    %s429 = scalar_lea.sflag [#allocation4], 1
    %430 = vsyncpa %s429, 1

</llo_original>
